<compile_context>
chip_gen: v7x
topology: tpu7x:2x2x1
jax: 0.10.0
libtpu: 0.0.40
codegen_flags: <defaults>
</compile_context>

<pallas_src>
import functools

import jax
import jax.numpy as jnp
from jax import lax
from jax.experimental import pallas as pl
from jax.experimental.pallas import tpu as pltpu


def _converter_kernel(t_ref, z_ref, dxdt_ref, w_zh_ref, wd_ref, b1_ref, bt_ref,
                      w2p_ref, b2p_ref, o_ref, *, Ci):
    z = z_ref[...]                                   # (B, Ci+Ch) f32

    # clamp only the h lanes (columns >= Ci)  ==  h.clamp(-1, 1); x lanes untouched
    col = lax.broadcasted_iota(jnp.int32, z.shape, 1)
    act = jnp.where(col >= Ci, jnp.clip(z, -1.0, 1.0), z)

    t = t_ref[0]                                     # SMEM scalar

    # synthetic model: tanh( [x|h] @ [Wx;Wh] + dxdt @ Wd + b1 + t*bt )
    # biases go through the VPU (broadcast adds), not the MXU.
    pre = (jnp.dot(act, w_zh_ref[...], preferred_element_type=jnp.float32)
           + jnp.dot(dxdt_ref[...], wd_ref[...], preferred_element_type=jnp.float32)
           + b1_ref[...] + t * bt_ref[...])
    model_out = jnp.tanh(pre)                        # (B, Ch)

    # one MXU pass emits [model_out | linear(model_out) | 0-pad] -> single
    # lane-dense (B, Npad) unmasked store.
    o_ref[...] = (jnp.dot(model_out, w2p_ref[...],
                          preferred_element_type=jnp.float32)
                  + b2p_ref[...]).astype(o_ref.dtype)


def prepack_converter_params(params, input_channels, hidden_channels):
    """One-time weight packing (hoisted off the per-step path)."""
    Ci, Ch = input_channels, hidden_channels
    No = Ch + (Ci + Ch)                               # merged output width
    Npad = ((No + 127) // 128) * 128                  # lane-dense output width

    w_zh = jnp.concatenate([params["wx"], params["wh"]],
                           axis=0).astype(jnp.float32)          # (Ci+Ch, Ch)
    wd = params["wd"].astype(jnp.float32)                       # (Ci, Ch)
    b1 = params["b1"].reshape(1, Ch).astype(jnp.float32)        # (1, Ch)
    bt = params["bt"].reshape(1, Ch).astype(jnp.float32)        # (1, Ch)

    # w2p = [I_Ch | linear_w.T | zeros] ; b2p = [0 | linear_b | zeros]
    w2p = jnp.zeros((Ch, Npad), jnp.float32)
    w2p = w2p.at[:, :Ch].set(jnp.eye(Ch, dtype=jnp.float32))
    w2p = w2p.at[:, Ch:No].set(params["linear_w"].T.astype(jnp.float32))
    b2p = jnp.zeros((1, Npad), jnp.float32)
    b2p = b2p.at[0, Ch:No].set(params["linear_b"].astype(jnp.float32))

    return {"w_zh": w_zh, "wd": wd, "b1": b1, "bt": bt, "w2p": w2p, "b2p": b2p}


@functools.partial(jax.jit, static_argnames=("input_channels", "hidden_channels"))
def continuous_delay_rnn_converter(t, z, dxdt, packed, *, input_channels,
                                   hidden_channels):
    """t: scalar; z: [B, Ci+Ch]; dxdt: [B, Ci].  Returns (model_out, out)."""
    Ci, Ch = input_channels, hidden_channels
    B = z.shape[0]
    No = Ch + (Ci + Ch)
    Npad = packed["w2p"].shape[1]                     # static from prepack

    t_arr = jnp.asarray(t, jnp.float32).reshape(1)
    z32 = z.astype(jnp.float32)
    dxdt32 = dxdt.astype(jnp.float32)

    vmem = pl.BlockSpec(memory_space=pltpu.MemorySpace.VMEM)
    smem = pl.BlockSpec(memory_space=pltpu.MemorySpace.SMEM)

    cost = pl.CostEstimate(
        flops=(2 * B * (Ci + Ch) * Ch + 2 * B * Ci * Ch + 2 * B * Ch * Npad
               + 4 * B * Ch),
        transcendentals=B * Ch,
        bytes_accessed=4 * (1 + B * (Ci + Ch) + B * Ci + (Ci + Ch) * Ch
                            + Ci * Ch + 2 * Ch + Ch * Npad + Npad + B * Npad),
    )

    merged = pl.pallas_call(
        functools.partial(_converter_kernel, Ci=Ci),
        out_shape=jax.ShapeDtypeStruct((B, Npad), jnp.float32),
        in_specs=[smem, vmem, vmem, vmem, vmem, vmem, vmem, vmem, vmem],
        out_specs=vmem,
        cost_estimate=cost,
    )(t_arr, z32, dxdt32, packed["w_zh"], packed["wd"],
      packed["b1"], packed["bt"], packed["w2p"], packed["b2p"])

    model_out = merged[:, :Ch]
    out = merged[:, Ch:No]
    return model_out, out


def _reference(t, z, dxdt, params, Ci, Ch):
    x = z[:, :Ci]
    h = jnp.clip(z[:, Ci:], -1.0, 1.0)
    pre = (x @ params["wx"] + h @ params["wh"] + dxdt @ params["wd"]
           + params["b1"][None, :] + t * params["bt"][None, :])
    mo = jnp.tanh(pre)
    out = mo @ params["linear_w"].T + params["linear_b"][None, :]
    return mo, out


if __name__ == "__main__":
    input_channels, hidden_channels = 4, 32
    batch = 8                       # multiple of 8 -> one full f32 sublane tile

    key = jax.random.PRNGKey(0)
    keys = jax.random.split(key, 10)

    params = {
        "wx": 0.1 * jax.random.normal(keys[0], (input_channels, hidden_channels), jnp.float32),
        "wh": 0.1 * jax.random.normal(keys[1], (hidden_channels, hidden_channels), jnp.float32),
        "wd": 0.1 * jax.random.normal(keys[2], (input_channels, hidden_channels), jnp.float32),
        "b1": 0.1 * jax.random.normal(keys[3], (hidden_channels,), jnp.float32),
        "bt": 0.1 * jax.random.normal(keys[4], (hidden_channels,), jnp.float32),
        # PyTorch nn.Linear(hidden, input+hidden): weight [out, in], bias [out]
        "linear_w": 0.1 * jax.random.normal(
            keys[5], (input_channels + hidden_channels, hidden_channels), jnp.float32),
        "linear_b": 0.1 * jax.random.normal(
            keys[6], (input_channels + hidden_channels,), jnp.float32),
    }

    z = jax.random.normal(keys[7], (batch, input_channels + hidden_channels), jnp.float32)
    dxdt = jax.random.normal(keys[8], (batch, input_channels), jnp.float32)
    t = jnp.float32(0.5)

    # one-time packing (kept off the per-step path)
    packed = prepack_converter_params(params, input_channels, hidden_channels)

    mo, out = continuous_delay_rnn_converter(
        t, z, dxdt, packed,
        input_channels=input_channels, hidden_channels=hidden_channels)
    jax.block_until_ready((mo, out))

    mo_ref, out_ref = _reference(t, z, dxdt, params, input_channels, hidden_channels)
    assert jnp.allclose(mo, mo_ref, atol=1e-4, rtol=1e-4), \
        float(jnp.max(jnp.abs(mo - mo_ref)))
    assert jnp.allclose(out, out_ref, atol=1e-4, rtol=1e-4), \
        float(jnp.max(jnp.abs(out - out_ref)))

    print("KERNEL_OK")
</pallas_src>

<mosaic_0001>
module attributes {stable_mosaic.version = 11 : i64} {
  func.func @_converter_kernel(%arg0: memref<1xf32, #tpu.memory_space<smem>>, %arg1: memref<8x36xf32, #tpu.memory_space<vmem>>, %arg2: memref<8x4xf32, #tpu.memory_space<vmem>>, %arg3: memref<36x32xf32, #tpu.memory_space<vmem>>, %arg4: memref<4x32xf32, #tpu.memory_space<vmem>>, %arg5: memref<1x32xf32, #tpu.memory_space<vmem>>, %arg6: memref<1x32xf32, #tpu.memory_space<vmem>>, %arg7: memref<32x128xf32, #tpu.memory_space<vmem>>, %arg8: memref<1x128xf32, #tpu.memory_space<vmem>>, %arg9: memref<8x128xf32, #tpu.memory_space<vmem>>) attributes {dimension_semantics = [], scalar_prefetch = 0 : i64, scratch_operands = 0 : i64, tpu.core_type = #tpu.core_type<tc>} {
    %c0 = arith.constant 0 : index
    %c0_0 = arith.constant 0 : index
    %0 = vector.load %arg1[%c0, %c0_0] : memref<8x36xf32, #tpu.memory_space<vmem>>, vector<8x36xf32>
    %1 = tpu.iota {dimensions = array<i32: 1>} : vector<8x36xi32>
    %c4_i32 = arith.constant 4 : i32
    %2 = vector.broadcast %c4_i32 : i32 to vector<8x36xi32>
    %3 = arith.cmpi sge, %1, %2 : vector<8x36xi32>
    %cst = arith.constant -1.000000e+00 : f32
    %cst_1 = arith.constant 1.000000e+00 : f32
    %4 = vector.broadcast %cst : f32 to vector<8x36xf32>
    %5 = arith.maximumf %4, %0 : vector<8x36xf32>
    %6 = vector.broadcast %cst_1 : f32 to vector<8x36xf32>
    %7 = arith.minimumf %6, %5 : vector<8x36xf32>
    %8 = arith.select %3, %7, %0 : vector<8x36xi1>, vector<8x36xf32>
    %c0_2 = arith.constant 0 : index
    %9 = memref.load %arg0[%c0_2] : memref<1xf32, #tpu.memory_space<smem>>
    %c0_3 = arith.constant 0 : index
    %c0_4 = arith.constant 0 : index
    %10 = vector.load %arg3[%c0_3, %c0_4] : memref<36x32xf32, #tpu.memory_space<vmem>>, vector<36x32xf32>
    %cst_5 = arith.constant dense<0.000000e+00> : vector<8x32xf32>
    %11 = tpu.matmul %8, %10, %cst_5 {dimension_numbers = #tpu.dot_dimension_numbers<[1], [0], [0], [1], [0, 0, 1, 1], [], []>} : vector<8x36xf32>, vector<36x32xf32>, vector<8x32xf32> -> vector<8x32xf32>
    %c0_6 = arith.constant 0 : index
    %c0_7 = arith.constant 0 : index
    %12 = vector.load %arg2[%c0_6, %c0_7] : memref<8x4xf32, #tpu.memory_space<vmem>>, vector<8x4xf32>
    %c0_8 = arith.constant 0 : index
    %c0_9 = arith.constant 0 : index
    %13 = vector.load %arg4[%c0_8, %c0_9] : memref<4x32xf32, #tpu.memory_space<vmem>>, vector<4x32xf32>
    %cst_10 = arith.constant dense<0.000000e+00> : vector<8x32xf32>
    %14 = tpu.matmul %12, %13, %cst_10 {dimension_numbers = #tpu.dot_dimension_numbers<[1], [0], [0], [1], [0, 0, 1, 1], [], []>} : vector<8x4xf32>, vector<4x32xf32>, vector<8x32xf32> -> vector<8x32xf32>
    %15 = arith.addf %11, %14 : vector<8x32xf32>
    %c0_11 = arith.constant 0 : index
    %c0_12 = arith.constant 0 : index
    %16 = vector.load %arg5[%c0_11, %c0_12] : memref<1x32xf32, #tpu.memory_space<vmem>>, vector<1x32xf32>
    %17 = vector.broadcast %16 : vector<1x32xf32> to vector<8x32xf32>
    %18 = arith.addf %15, %17 : vector<8x32xf32>
    %c0_13 = arith.constant 0 : index
    %c0_14 = arith.constant 0 : index
    %19 = vector.load %arg6[%c0_13, %c0_14] : memref<1x32xf32, #tpu.memory_space<vmem>>, vector<1x32xf32>
    %20 = vector.broadcast %9 : f32 to vector<1x32xf32>
    %21 = arith.mulf %20, %19 : vector<1x32xf32>
    %22 = vector.broadcast %21 : vector<1x32xf32> to vector<8x32xf32>
    %23 = arith.addf %18, %22 : vector<8x32xf32>
    %24 = math.tanh %23 : vector<8x32xf32>
    %c0_15 = arith.constant 0 : index
    %c0_16 = arith.constant 0 : index
    %25 = vector.load %arg7[%c0_15, %c0_16] : memref<32x128xf32, #tpu.memory_space<vmem>>, vector<32x128xf32>
    %cst_17 = arith.constant dense<0.000000e+00> : vector<8x128xf32>
    %26 = tpu.matmul %24, %25, %cst_17 {dimension_numbers = #tpu.dot_dimension_numbers<[1], [0], [0], [1], [0, 0, 1, 1], [], []>} : vector<8x32xf32>, vector<32x128xf32>, vector<8x128xf32> -> vector<8x128xf32>
    %c0_18 = arith.constant 0 : index
    %c0_19 = arith.constant 0 : index
    %27 = vector.load %arg8[%c0_18, %c0_19] : memref<1x128xf32, #tpu.memory_space<vmem>>, vector<1x128xf32>
    %28 = vector.broadcast %27 : vector<1x128xf32> to vector<8x128xf32>
    %29 = arith.addf %26, %28 : vector<8x128xf32>
    %c0_20 = arith.constant 0 : index
    %c0_21 = arith.constant 0 : index
    %30 = vector.load %arg9[%c0_20, %c0_21] : memref<8x128xf32, #tpu.memory_space<vmem>>, vector<8x128xf32>
    tpu.vector_store %arg9[%c0_20, %c0_21], %29 {strides = array<i32>} : memref<8x128xf32, #tpu.memory_space<vmem>>, vector<8x128xf32>,
    return
  }
}

</mosaic_0001>

<llo_original>
// kernel: continuous_delay_rnn_converter.1
$region0: #{continuous_delay_rnn_converter.1}
  #allocation0 [shape = 'u32[]', space=smem, size = 0x4, offset = 0x4, fixed_abs, tag = 'smem constant byte address 0x4 - core index']
  #allocation1 [shape = 'u32[144,128]{1,0:T(1,128)}', space=vmem, size = 0x12000, scoped, tag = 'internal scratch']
  #allocation2 [shape = 'f32[1]{0:T(128)S(6)}', space=smem, size = 0x200, scoped, tag = 'scoped memory for continuous_delay_rnn_converter.1']
  %s0 = inlined_call_operand.<no memory space> [shape: f32[1], index: 0, kind: input, shape index: {}]
  %s1 = inlined_call_operand.vmem [shape: f32[8,36], index: 1, kind: input, shape index: {}]
  %s2 = inlined_call_operand.vmem [shape: f32[8,4], index: 2, kind: input, shape index: {}]
  %s3 = inlined_call_operand.vmem [shape: f32[36,32], index: 3, kind: input, shape index: {}]
  %s4 = inlined_call_operand.vmem [shape: f32[4,32], index: 4, kind: input, shape index: {}]
  %s5 = inlined_call_operand.vmem [shape: f32[1,32], index: 5, kind: input, shape index: {}]
  %s6 = inlined_call_operand.vmem [shape: f32[1,32], index: 6, kind: input, shape index: {}]
  %s7 = inlined_call_operand.vmem [shape: f32[32,128], index: 7, kind: input, shape index: {}]
  %s8 = inlined_call_operand.vmem [shape: f32[1,128], index: 8, kind: input, shape index: {}]
  %s9 = inlined_call_operand.vmem [shape: f32[8,128], index: 9, kind: output, shape index: {}]
  %s10 = sld [smem:[#allocation0]]
  $region46: #{continuous_delay_rnn_converter.1} parent=0
    _
  %s12 = ssub.s32 1, %s10
  %s13 = scalar_select 0, %s12, %s10
  %14 = sst [smem:[#allocation2]] %s0
  // Predicated region
  $region2: #{continuous_delay_rnn_converter.1} parent=0 // pred_check
    _
  $region3: #{continuous_delay_rnn_converter.1} parent=0 // pred_check_branch
    %16 = sbr.rel (0) target = $region5
  $region4: #{continuous_delay_rnn_converter.1} parent=0 // pred_region
    _
  $region5: #{continuous_delay_rnn_converter.1} parent=0 // pred_fallthru
    _
  // Predicated region
  $region6: #{continuous_delay_rnn_converter.1} parent=0 // pred_check
    _
  $region7: #{continuous_delay_rnn_converter.1} parent=0 // pred_check_branch
    %18 = sbr.rel (0) target = $region9
  $region8: #{continuous_delay_rnn_converter.1} parent=0 // pred_region
    _
  $region9: #{continuous_delay_rnn_converter.1} parent=0 // pred_fallthru
    _
  // Predicated region
  $region10: #{continuous_delay_rnn_converter.1} parent=0 // pred_check
    _
  $region11: #{continuous_delay_rnn_converter.1} parent=0 // pred_check_branch
    %20 = sbr.rel (0) target = $region13
  $region12: #{continuous_delay_rnn_converter.1} parent=0 // pred_region
    _
  $region13: #{continuous_delay_rnn_converter.1} parent=0 // pred_fallthru
    _
  // Predicated region
  $region14: #{continuous_delay_rnn_converter.1} parent=0 // pred_check
    _
  $region15: #{continuous_delay_rnn_converter.1} parent=0 // pred_check_branch
    %22 = sbr.rel (0) target = $region17
  $region16: #{continuous_delay_rnn_converter.1} parent=0 // pred_region
    _
  $region17: #{continuous_delay_rnn_converter.1} parent=0 // pred_fallthru
    _
  // Predicated region
  $region18: #{continuous_delay_rnn_converter.1} parent=0 // pred_check
    _
  $region19: #{continuous_delay_rnn_converter.1} parent=0 // pred_check_branch
    %24 = sbr.rel (0) target = $region21
  $region20: #{continuous_delay_rnn_converter.1} parent=0 // pred_region
    _
  $region21: #{continuous_delay_rnn_converter.1} parent=0 // pred_fallthru
    _
  // Predicated region
  $region22: #{continuous_delay_rnn_converter.1} parent=0 // pred_check
    _
  $region23: #{continuous_delay_rnn_converter.1} parent=0 // pred_check_branch
    %26 = sbr.rel (0) target = $region25
  $region24: #{continuous_delay_rnn_converter.1} parent=0 // pred_region
    _
  $region25: #{continuous_delay_rnn_converter.1} parent=0 // pred_fallthru
    _
  // Predicated region
  $region26: #{continuous_delay_rnn_converter.1} parent=0 // pred_check
    _
  $region27: #{continuous_delay_rnn_converter.1} parent=0 // pred_check_branch
    %28 = sbr.rel (0) target = $region29
  $region28: #{continuous_delay_rnn_converter.1} parent=0 // pred_region
    _
  $region29: #{continuous_delay_rnn_converter.1} parent=0 // pred_fallthru
    _
  // Predicated region
  $region30: #{continuous_delay_rnn_converter.1} parent=0 // pred_check
    _
  $region31: #{continuous_delay_rnn_converter.1} parent=0 // pred_check_branch
    %30 = sbr.rel (0) target = $region33
  $region32: #{continuous_delay_rnn_converter.1} parent=0 // pred_region
    _
  $region33: #{continuous_delay_rnn_converter.1} parent=0 // pred_fallthru
    _
  // Predicated region
  $region34: #{continuous_delay_rnn_converter.1} parent=0 // pred_check
    _
  $region35: #{continuous_delay_rnn_converter.1} parent=0 // pred_check_branch
    %32 = sbr.rel (0) target = $region37
  $region36: #{continuous_delay_rnn_converter.1} parent=0 // pred_region
    _
  $region37: #{continuous_delay_rnn_converter.1} parent=0 // pred_fallthru
    _
  %v33 = vld [vmem:[%s1] sm:$0xff]
  %v34 = vlaneseq
  %v35 = vand.u32 %v34, 127
  %vm36 = vcmp.ge.s32.totalorder %v35, 4
  %v37 = vmax.f32 %v33, -1.0
  %v38 = vmin.f32 %v37, 1.0
  %v39 = vsel %vm36, %v38, %v33
  %s40 = sld [smem:[#allocation2]]
  %v41 = vld [vmem:[%s3] sm:$0xff]
  %v42 = vld [vmem:[%s3 + $0x8] sm:$0xff]
  %v43 = vld [vmem:[%s3 + $0x10] sm:$0xff]
  %v44 = vld [vmem:[%s3 + $0x18] sm:$0xff]
  %v45 = vld [vmem:[%s3 + $0x20] sm:$0xf]
  %v46 = vld [vmem:[%s2] sm:$0xff]
  %v47 = vld [vmem:[%s4] sm:$0xf]
  %vm48 = vcmask 31744
  %v50 = vsel %vm48, %v46, 0
  %vm52 = vcmask 1043456
  %v54 = vsel %vm52, %v47, 0
  %56 = vmatprep.subr.mxu0 0.0
  %57 = vmatpush1.msra.mxu0 %v54
  %58 = vmatprep.subr.mxu0 0.0
  %59 = vmatpush1.msra.mxu0 0.0
  %60 = vmatprep.subr.mxu0 0.0
  %61 = vmatpush1.msra.mxu0 0.0
  %62 = vmatprep.subr.mxu0 0.0
  %63 = vmatpush1.msra.mxu0 0.0
  %64 = vmatprep.subr.mxu0 0.0
  %65 = vmatpush1.msra.mxu0 0.0
  %66 = vmatprep.subr.mxu0 0.0
  %67 = vmatpush1.msra.mxu0 0.0
  %68 = vmatprep.subr.mxu0 0.0
  %69 = vmatpush1.msra.mxu0 0.0
  %70 = vmatprep.subr.mxu0 0.0
  %71 = vmatpush1.msra.mxu0 0.0
  %72 = vmatprep.subr.mxu0 0.0
  %73 = vmatpush1.msra.mxu0 0.0
  %74 = vmatprep.subr.mxu0 0.0
  %75 = vmatpush1.msra.mxu0 0.0
  %76 = vmatprep.subr.mxu0 0.0
  %77 = vmatpush1.msra.mxu0 0.0
  %78 = vmatprep.subr.mxu0 0.0
  %79 = vmatpush1.msra.mxu0 0.0
  %80 = vmatprep.subr.mxu0 0.0
  %81 = vmatpush1.msra.mxu0 0.0
  %82 = vmatprep.subr.mxu0 0.0
  %83 = vmatpush1.msra.mxu0 0.0
  %84 = vmatprep.subr.mxu0 0.0
  %85 = vmatpush1.msra.mxu0 0.0
  %86 = vmatprep.subr.mxu0 0.0
  %87 = vmatpush1.msra.mxu0 0.0
  %88 = vmatprep.subr.mxu0 0.0
  %89 = vmatpush1.msra.mxu0 0.0
  %90 = vmatprep.subr.mxu0 0.0
  %91 = vmatpush1.msra.mxu0 0.0
  %92 = vmatprep.subr.mxu0 0.0
  %93 = vmatpush1.msra.mxu0 0.0
  %94 = vmatprep.subr.mxu0 0.0
  %95 = vmatpush1.msra.mxu0 0.0
  %96 = vmatprep.subr.mxu0 0.0
  %97 = vmatpush1.msra.mxu0 0.0
  %98 = vmatprep.subr.mxu0 0.0
  %99 = vmatpush1.msra.mxu0 0.0
  %100 = vmatprep.subr.mxu0 0.0
  %101 = vmatpush1.msra.mxu0 0.0
  %102 = vmatprep.subr.mxu0 0.0
  %103 = vmatpush1.msra.mxu0 0.0
  %104 = vmatprep.subr.mxu0 0.0
  %105 = vmatpush1.msra.mxu0 0.0
  %106 = vmatprep.subr.mxu0 0.0
  %107 = vmatpush1.msra.mxu0 0.0
  %108 = vmatprep.subr.mxu0 0.0
  %109 = vmatpush1.msra.mxu0 0.0
  %110 = vmatprep.subr.mxu0 0.0
  %111 = vmatpush1.msra.mxu0 0.0
  %112 = vmatprep.subr.mxu0 0.0
  %113 = vmatpush1.msra.mxu0 0.0
  %114 = vmatprep.subr.mxu0 0.0
  %115 = vmatpush1.msra.mxu0 0.0
  %116 = vmatprep.subr.mxu0 0.0
  %117 = vmatpush1.msra.mxu0 0.0
  %118 = vmatprep.subr.mxu0 0.0
  %119 = vmatpush1.msra.mxu0 0.0
  %120 = vmatprep.mubr.f32.mxu0 0.0
  %121 = vmatmul.mubr.f32.gmra.mrb[0].mxu0 %v50
  %v122 = vpop.f32.mrb[0].mxu0
  %v123 = vadd.f32 0.0, %v122
  %v124 = vpop.f32.mrb[0].mxu0
  %125 = vdwg.mxu0
  %vm126 = vcmask 293888
  %v128 = vsel %vm126, %v39, 0
  %v131 = vsel %vm52, %v45, 0
  %133 = vmatprep.subr.mxu0 0.0
  %134 = vmatpush1.msra.mxu0 %v41
  %135 = vmatprep.subr.mxu0 0.0
  %136 = vmatpush1.msra.mxu0 %v42
  %137 = vmatprep.subr.mxu0 0.0
  %138 = vmatpush1.msra.mxu0 %v43
  %139 = vmatprep.subr.mxu0 0.0
  %140 = vmatpush1.msra.mxu0 %v44
  %141 = vmatprep.subr.mxu0 0.0
  %142 = vmatpush1.msra.mxu0 %v131
  %143 = vmatprep.subr.mxu0 0.0
  %144 = vmatpush1.msra.mxu0 0.0
  %145 = vmatprep.subr.mxu0 0.0
  %146 = vmatpush1.msra.mxu0 0.0
  %147 = vmatprep.subr.mxu0 0.0
  %148 = vmatpush1.msra.mxu0 0.0
  %149 = vmatprep.subr.mxu0 0.0
  %150 = vmatpush1.msra.mxu0 0.0
  %151 = vmatprep.subr.mxu0 0.0
  %152 = vmatpush1.msra.mxu0 0.0
  %153 = vmatprep.subr.mxu0 0.0
  %154 = vmatpush1.msra.mxu0 0.0
  %155 = vmatprep.subr.mxu0 0.0
  %156 = vmatpush1.msra.mxu0 0.0
  %157 = vmatprep.subr.mxu0 0.0
  %158 = vmatpush1.msra.mxu0 0.0
  %159 = vmatprep.subr.mxu0 0.0
  %160 = vmatpush1.msra.mxu0 0.0
  %161 = vmatprep.subr.mxu0 0.0
  %162 = vmatpush1.msra.mxu0 0.0
  %163 = vmatprep.subr.mxu0 0.0
  %164 = vmatpush1.msra.mxu0 0.0
  %165 = vmatprep.subr.mxu0 0.0
  %166 = vmatpush1.msra.mxu0 0.0
  %167 = vmatprep.subr.mxu0 0.0
  %168 = vmatpush1.msra.mxu0 0.0
  %169 = vmatprep.subr.mxu0 0.0
  %170 = vmatpush1.msra.mxu0 0.0
  %171 = vmatprep.subr.mxu0 0.0
  %172 = vmatpush1.msra.mxu0 0.0
  %173 = vmatprep.subr.mxu0 0.0
  %174 = vmatpush1.msra.mxu0 0.0
  %175 = vmatprep.subr.mxu0 0.0
  %176 = vmatpush1.msra.mxu0 0.0
  %177 = vmatprep.subr.mxu0 0.0
  %178 = vmatpush1.msra.mxu0 0.0
  %179 = vmatprep.subr.mxu0 0.0
  %180 = vmatpush1.msra.mxu0 0.0
  %181 = vmatprep.subr.mxu0 0.0
  %182 = vmatpush1.msra.mxu0 0.0
  %183 = vmatprep.subr.mxu0 0.0
  %184 = vmatpush1.msra.mxu0 0.0
  %185 = vmatprep.subr.mxu0 0.0
  %186 = vmatpush1.msra.mxu0 0.0
  %187 = vmatprep.subr.mxu0 0.0
  %188 = vmatpush1.msra.mxu0 0.0
  %189 = vmatprep.subr.mxu0 0.0
  %190 = vmatpush1.msra.mxu0 0.0
  %191 = vmatprep.subr.mxu0 0.0
  %192 = vmatpush1.msra.mxu0 0.0
  %193 = vmatprep.subr.mxu0 0.0
  %194 = vmatpush1.msra.mxu0 0.0
  %195 = vmatprep.subr.mxu0 0.0
  %196 = vmatpush1.msra.mxu0 0.0
  %197 = vmatprep.mubr.f32.mxu0 0.0
  %198 = vmatmul.mubr.f32.gmra.mrb[0].mxu0 %v128
  %v199 = vpop.f32.mrb[0].mxu0
  %v200 = vadd.f32 %v123, %v199
  %v201 = vpop.f32.mrb[0].mxu0
  %202 = vdwg.mxu0
  %v203 = vld [vmem:[%s5] sm:$0x1]
  %v205 = vlaneseq
  %v206 = vshrl.u32 %v205, 7
  %v207 = vsub.s32 0, %v206
  %v208 = vrot.slane %v203, %v207
  %v210 = vadd.f32 %v200, %v208
  %v211 = vld [vmem:[%s6] sm:$0x1]
  %v212 = vstv %s40
  %v213 = vmul.f32 %v212, %v211
  %v215 = vlaneseq
  %v216 = vshrl.u32 %v215, 7
  %v217 = vsub.s32 0, %v216
  %v218 = vrot.slane %v213, %v217
  %v220 = vadd.f32 %v210, %v218
  %v221 = vtanh.pop %v220
  %v222 = vld [vmem:[%s7] sm:$0xff]
  %v223 = vld [vmem:[%s7 + $0x8] sm:$0xff]
  %v224 = vld [vmem:[%s7 + $0x10] sm:$0xff]
  %v225 = vld [vmem:[%s7 + $0x18] sm:$0xff]
  %v226 = vld [vmem:[%s8] sm:$0x1]
  %v228 = vlaneseq
  %v229 = vshrl.u32 %v228, 7
  %v230 = vsub.s32 0, %v229
  %v231 = vrot.slane %v226, %v230
  %vm233 = vcmask 261120
  %v235 = vsel %vm233, %v221, 0
  %237 = vmatprep.subr.mxu0 0.0
  %238 = vmatpush1.msra.mxu0 %v222
  %239 = vmatprep.subr.mxu0 0.0
  %240 = vmatpush1.msra.mxu0 %v223
  %241 = vmatprep.subr.mxu0 0.0
  %242 = vmatpush1.msra.mxu0 %v224
  %243 = vmatprep.subr.mxu0 0.0
  %244 = vmatpush1.msra.mxu0 %v225
  %245 = vmatprep.subr.mxu0 0.0
  %246 = vmatpush1.msra.mxu0 0.0
  %247 = vmatprep.subr.mxu0 0.0
  %248 = vmatpush1.msra.mxu0 0.0
  %249 = vmatprep.subr.mxu0 0.0
  %250 = vmatpush1.msra.mxu0 0.0
  %251 = vmatprep.subr.mxu0 0.0
  %252 = vmatpush1.msra.mxu0 0.0
  %253 = vmatprep.subr.mxu0 0.0
  %254 = vmatpush1.msra.mxu0 0.0
  %255 = vmatprep.subr.mxu0 0.0
  %256 = vmatpush1.msra.mxu0 0.0
  %257 = vmatprep.subr.mxu0 0.0
  %258 = vmatpush1.msra.mxu0 0.0
  %259 = vmatprep.subr.mxu0 0.0
  %260 = vmatpush1.msra.mxu0 0.0
  %261 = vmatprep.subr.mxu0 0.0
  %262 = vmatpush1.msra.mxu0 0.0
  %263 = vmatprep.subr.mxu0 0.0
  %264 = vmatpush1.msra.mxu0 0.0
  %265 = vmatprep.subr.mxu0 0.0
  %266 = vmatpush1.msra.mxu0 0.0
  %267 = vmatprep.subr.mxu0 0.0
  %268 = vmatpush1.msra.mxu0 0.0
  %269 = vmatprep.subr.mxu0 0.0
  %270 = vmatpush1.msra.mxu0 0.0
  %271 = vmatprep.subr.mxu0 0.0
  %272 = vmatpush1.msra.mxu0 0.0
  %273 = vmatprep.subr.mxu0 0.0
  %274 = vmatpush1.msra.mxu0 0.0
  %275 = vmatprep.subr.mxu0 0.0
  %276 = vmatpush1.msra.mxu0 0.0
  %277 = vmatprep.subr.mxu0 0.0
  %278 = vmatpush1.msra.mxu0 0.0
  %279 = vmatprep.subr.mxu0 0.0
  %280 = vmatpush1.msra.mxu0 0.0
  %281 = vmatprep.subr.mxu0 0.0
  %282 = vmatpush1.msra.mxu0 0.0
  %283 = vmatprep.subr.mxu0 0.0
  %284 = vmatpush1.msra.mxu0 0.0
  %285 = vmatprep.subr.mxu0 0.0
  %286 = vmatpush1.msra.mxu0 0.0
  %287 = vmatprep.subr.mxu0 0.0
  %288 = vmatpush1.msra.mxu0 0.0
  %289 = vmatprep.subr.mxu0 0.0
  %290 = vmatpush1.msra.mxu0 0.0
  %291 = vmatprep.subr.mxu0 0.0
  %292 = vmatpush1.msra.mxu0 0.0
  %293 = vmatprep.subr.mxu0 0.0
  %294 = vmatpush1.msra.mxu0 0.0
  %295 = vmatprep.subr.mxu0 0.0
  %296 = vmatpush1.msra.mxu0 0.0
  %297 = vmatprep.subr.mxu0 0.0
  %298 = vmatpush1.msra.mxu0 0.0
  %299 = vmatprep.subr.mxu0 0.0
  %300 = vmatpush1.msra.mxu0 0.0
  %301 = vmatprep.mubr.f32.mxu0 0.0
  %302 = vmatmul.mubr.f32.gmra.mrb[0].mxu0 %v235
  %v303 = vpop.f32.mrb[0].mxu0
  %v304 = vadd.f32 %v231, %v303
  %v305 = vpop.f32.mrb[0].mxu0
  %306 = vdwg.mxu0
  %307 = vst [vmem:[%s9] sm:$0xff] %v304
  // Predicated region
  $region38: #{continuous_delay_rnn_converter.1} parent=0 // pred_check
    _
  $region39: #{continuous_delay_rnn_converter.1} parent=0 // pred_check_branch
    %309 = sbr.rel (0) target = $region41
  $region40: #{continuous_delay_rnn_converter.1} parent=0 // pred_region
    _
  $region41: #{continuous_delay_rnn_converter.1} parent=0 // pred_fallthru
    _
  // Predicated region
  $region42: #{continuous_delay_rnn_converter.1} parent=0 // pred_check
    _
  $region43: #{continuous_delay_rnn_converter.1} parent=0 // pred_check_branch
    %311 = sbr.rel (0) target = $region45
  $region44: #{continuous_delay_rnn_converter.1} parent=0 // pred_region
    _
  $region45: #{continuous_delay_rnn_converter.1} parent=0 // pred_fallthru
    _

</llo_original>
